<compile_context>
chip_gen: v7x
topology: tpu7x:2x2x1
jax: 0.10.0
libtpu: 0.0.40
codegen_flags: <defaults>
</compile_context>

<pallas_src>
import functools

import jax
import jax.numpy as jnp
from jax.experimental import pallas as pl
from jax.experimental.pallas import tpu as pltpu


_OUT_BLOCK = (8, 128)   # one lane-dense f32 block of partial sum per tile


def _label_smoothing_kernel(pred_ref, tgt_ref, out_ref, *, smoothing, n_rows):
    confidence = 1.0 - smoothing

    pred = pred_ref[...].astype(jnp.float32)          # (T, C) logits (one upcast per tile)
    tgt = tgt_ref[...]                                # (T, 1) int32
    t, c = pred.shape

    # Stable log-normalizer per row: logZ = max + log(sum exp(pred - max)).
    m = jnp.max(pred, axis=-1, keepdims=True)                          # (T, 1)
    lse = jnp.log(jnp.sum(jnp.exp(pred - m), axis=-1, keepdims=True))  # (T, 1)
    logz = m + lse                                                     # (T, 1)

    # Folded target/smoothing reduction (single weighted sum instead of the
    # separate sum(pred) and masked pred[target] reductions):
    #   row_loss = -sum_c w_c * (pred_c - logZ) = logZ - sum_c w_c * pred_c
    # because sum_c w_c = confidence + smoothing = 1.
    col = jax.lax.broadcasted_iota(jnp.int32, (t, c), 1)
    w = jnp.where(col == tgt, confidence + smoothing / c, smoothing / c)
    wsum = jnp.sum(w * pred, axis=-1, keepdims=True)                   # (T, 1)

    row_loss = logz - wsum                                             # (T, 1)

    # Mask rows of the last partial tile so they contribute exactly zero
    # (select-based, so garbage/NaN in out-of-range rows cannot leak through).
    row0 = pl.program_id(0) * t
    rid = row0 + jax.lax.broadcasted_iota(jnp.int32, (t, 1), 0)
    masked = jnp.where(rid < n_rows, row_loss, 0.0)

    # Per-tile partial sum, spread over one lane-dense (8,128) block so the
    # store is an unmasked vst and jnp.sum(out) recovers sum(row_loss).
    ts = jnp.sum(masked, axis=0, keepdims=True)                        # (1, 1)
    scale = 1.0 / float(out_ref.shape[0] * out_ref.shape[1])
    out_ref[...] = jnp.broadcast_to(ts * scale, out_ref.shape)


def _sublane_multiple(itemsize):
    # vreg sublane packing: 8 rows for 4-byte, 16 for 2-byte, 32 for 1-byte dtypes.
    return {4: 8, 2: 16, 1: 32}.get(itemsize, 8)


def _choose_tile_n(n, c, sublane):
    # Element-count budget: <= ~1M elements per pred tile => <= ~4 MiB per f32
    # (T,C) temporary, so (2 pipelined input buffers + ~5 tile-sized temps)
    # stays well under v7x's 64 MiB VMEM, while >=512-row tiles already sit at
    # ~85% of the HBM roofline (per-step overhead ~0.35 us).
    budget_elems = 1 << 20
    t = max(sublane, budget_elems // max(1, c))
    t = min(t, 1024)
    # Prefer >= 4 tiles so the "parallel" batch axis load-balances across both
    # v7x TensorCores and the double-buffered pipeline has a steady state.
    quarter = -(-n // 4)
    quarter = -(-quarter // sublane) * sublane       # round up to sublane multiple
    t = min(t, quarter)
    t = max(sublane, (t // sublane) * sublane)       # round down to sublane multiple
    return t


def label_smoothing_loss(pred, target, smoothing=0.1):
    """pred: (N, C) float logits (keep bf16 inputs as bf16 -- the kernel upcasts
    per tile); target: (N,) int labels. Returns scalar f32 mean loss."""
    n, c = pred.shape
    itemsize = jnp.dtype(pred.dtype).itemsize
    sublane = _sublane_multiple(itemsize)
    tile_n = _choose_tile_n(n, c, sublane)
    num_tiles = -(-n // tile_n)

    tgt2d = target.astype(jnp.int32).reshape(n, 1)

    tile_elems = tile_n * c
    # 2 double-buffered pred input tiles + ~5 in-kernel (T,C) f32/int32
    # temporaries (f32 upcast, exp(pred-m), col iota, weight mask, product)
    # + small (T,1)/(8,128) vectors + slack; clamped to a v7x-safe ceiling
    # (64 MiB physical VMEM per TensorCore).
    vmem_bytes = (2 * tile_elems * itemsize
                  + 5 * tile_elems * 4
                  + 8 * tile_n * 4
                  + 2 * _OUT_BLOCK[0] * _OUT_BLOCK[1] * 4
                  + (1 << 20))
    vmem_bytes = int(min(max(vmem_bytes, 4 << 20), 48 << 20))

    kernel = functools.partial(
        _label_smoothing_kernel, smoothing=float(smoothing), n_rows=n
    )

    # TODO(synk): if a profile ever shows exposed DMA with these smaller tiles,
    # set pipeline_mode=pl.Buffered(3) on the pred BlockSpec.
    partial = pl.pallas_call(
        kernel,
        out_shape=jax.ShapeDtypeStruct(
            (num_tiles * _OUT_BLOCK[0], _OUT_BLOCK[1]), jnp.float32),
        grid=(num_tiles,),
        in_specs=[
            pl.BlockSpec((tile_n, c), lambda i: (i, 0)),
            pl.BlockSpec((tile_n, 1), lambda i: (i, 0)),
        ],
        out_specs=pl.BlockSpec(_OUT_BLOCK, lambda i: (i, 0)),
        compiler_params=pltpu.CompilerParams(
            dimension_semantics=("parallel",),
            vmem_limit_bytes=vmem_bytes,
        ),
        cost_estimate=pl.CostEstimate(
            flops=6 * n * c,
            transcendentals=n * c,
            bytes_accessed=n * c * itemsize + n * 4
            + num_tiles * _OUT_BLOCK[0] * _OUT_BLOCK[1] * 4,
        ),
    )(pred, tgt2d)

    # Padded rows were masked to zero inside the kernel; mean over the true N.
    return jnp.sum(partial) / n


def _reference(pred, target, smoothing=0.1):
    confidence = 1.0 - smoothing
    logp = jax.nn.log_softmax(pred.astype(jnp.float32), axis=-1)
    c = pred.shape[-1]
    true_dist = jax.nn.one_hot(target, c, dtype=jnp.float32) * confidence + smoothing / c
    return jnp.mean(jnp.sum(-true_dist * logp, axis=-1))


if __name__ == "__main__":
    key = jax.random.PRNGKey(0)
    k1, k2, k3, k4, k5, k6 = jax.random.split(key, 6)
    smoothing = 0.1

    # Primary small check (matches the module's expected layout: (N, C) logits).
    N, C = 8, 32
    pred = jax.random.normal(k1, (N, C), dtype=jnp.float32)
    target = jax.random.randint(k2, (N,), 0, C, dtype=jnp.int32)
    loss = label_smoothing_loss(pred, target, smoothing=smoothing)
    jax.block_until_ready(loss)
    ref = _reference(pred, target, smoothing=smoothing)
    assert jnp.allclose(loss, ref, atol=1e-5, rtol=1e-5), (loss, ref)

    # Multi-tile check exercising a partial (masked) last tile and >1 grid step.
    N2, C2 = 20, 160
    pred2 = jax.random.normal(k3, (N2, C2), dtype=jnp.float32)
    target2 = jax.random.randint(k4, (N2,), 0, C2, dtype=jnp.int32)
    loss2 = label_smoothing_loss(pred2, target2, smoothing=smoothing)
    jax.block_until_ready(loss2)
    ref2 = _reference(pred2, target2, smoothing=smoothing)
    assert jnp.allclose(loss2, ref2, atol=1e-5, rtol=1e-5), (loss2, ref2)

    # bf16 path: HBM-side logits stay bf16 (16-row sublane tile), kernel upcasts.
    N3, C3 = 16, 256
    pred3 = jax.random.normal(k5, (N3, C3), dtype=jnp.bfloat16)
    target3 = jax.random.randint(k6, (N3,), 0, C3, dtype=jnp.int32)
    loss3 = label_smoothing_loss(pred3, target3, smoothing=smoothing)
    jax.block_until_ready(loss3)
    ref3 = _reference(pred3, target3, smoothing=smoothing)
    assert jnp.allclose(loss3, ref3, atol=1e-4, rtol=1e-4), (loss3, ref3)

    print("KERNEL_OK")
</pallas_src>

<mosaic_0001>
module attributes {stable_mosaic.version = 11 : i64} {
  func.func @_label_smoothing_kernel(%arg0: i32, %arg1: memref<8x32xf32, #tpu.memory_space<vmem>>, %arg2: memref<8x1xi32, #tpu.memory_space<vmem>>, %arg3: memref<8x128xf32, #tpu.memory_space<vmem>>) attributes {dimension_semantics = [#tpu.dimension_semantics<parallel>], iteration_bounds = array<i64: 1>, scalar_prefetch = 0 : i64, scratch_operands = 0 : i64, tpu.core_type = #tpu.core_type<tc>, window_params = [{transform_indices = @transform_0, window_bounds = array<i64: 8, 32>}, {transform_indices = @transform_1, window_bounds = array<i64: 8, 1>}, {transform_indices = @transform_2, window_bounds = array<i64: 8, 128>}]} {
    %c0 = arith.constant 0 : index
    %c0_0 = arith.constant 0 : index
    %0 = vector.load %arg1[%c0, %c0_0] : memref<8x32xf32, #tpu.memory_space<vmem>>, vector<8x32xf32>
    %c0_1 = arith.constant 0 : index
    %c0_2 = arith.constant 0 : index
    %1 = vector.load %arg2[%c0_1, %c0_2] : memref<8x1xi32, #tpu.memory_space<vmem>>, vector<8x1xi32>
    %cst = arith.constant dense<0xFF800000> : vector<8xf32>
    %2 = vector.multi_reduction <maximumf>, %0, %cst [1] : vector<8x32xf32> to vector<8xf32>
    %3 = vector.shape_cast %2 : vector<8xf32> to vector<8x1xf32>
    %4 = vector.broadcast %3 : vector<8x1xf32> to vector<8x32xf32>
    %5 = arith.subf %0, %4 : vector<8x32xf32>
    %6 = math.exp %5 : vector<8x32xf32>
    %cst_3 = arith.constant dense<0.000000e+00> : vector<8xf32>
    %7 = vector.multi_reduction <add>, %6, %cst_3 [1] : vector<8x32xf32> to vector<8xf32>
    %8 = vector.shape_cast %7 : vector<8xf32> to vector<8x1xf32>
    %9 = math.log %8 : vector<8x1xf32>
    %10 = arith.addf %3, %9 : vector<8x1xf32>
    %11 = tpu.iota {dimensions = array<i32: 1>} : vector<8x32xi32>
    %12 = vector.broadcast %1 : vector<8x1xi32> to vector<8x32xi32>
    %13 = arith.cmpi eq, %11, %12 : vector<8x32xi32>
    %cst_4 = arith.constant 0.903124988 : f32
    %cst_5 = arith.constant 3.125000e-03 : f32
    %14 = vector.broadcast %cst_4 : f32 to vector<8x32xf32>
    %15 = vector.broadcast %cst_5 : f32 to vector<8x32xf32>
    %16 = arith.select %13, %14, %15 : vector<8x32xi1>, vector<8x32xf32>
    %17 = arith.mulf %16, %0 : vector<8x32xf32>
    %cst_6 = arith.constant dense<0.000000e+00> : vector<8xf32>
    %18 = vector.multi_reduction <add>, %17, %cst_6 [1] : vector<8x32xf32> to vector<8xf32>
    %19 = vector.shape_cast %18 : vector<8xf32> to vector<8x1xf32>
    %20 = arith.subf %10, %19 : vector<8x1xf32>
    %c8_i32 = arith.constant 8 : i32
    %21 = arith.muli %arg0, %c8_i32 : i32
    %22 = tpu.iota {dimensions = array<i32: 0>} : vector<8x1xi32>
    %23 = vector.broadcast %21 : i32 to vector<8x1xi32>
    %24 = arith.addi %23, %22 : vector<8x1xi32>
    %c8_i32_7 = arith.constant 8 : i32
    %25 = vector.broadcast %c8_i32_7 : i32 to vector<8x1xi32>
    %26 = arith.cmpi slt, %24, %25 : vector<8x1xi32>
    %cst_8 = arith.constant 0.000000e+00 : f32
    %27 = vector.broadcast %cst_8 : f32 to vector<8x1xf32>
    %28 = arith.select %26, %20, %27 : vector<8x1xi1>, vector<8x1xf32>
    %cst_9 = arith.constant dense<0.000000e+00> : vector<1xf32>
    %29 = vector.multi_reduction <add>, %28, %cst_9 [0] : vector<8x1xf32> to vector<1xf32>
    %30 = vector.shape_cast %29 : vector<1xf32> to vector<1x1xf32>
    %cst_10 = arith.constant 9.765625E-4 : f32
    %31 = vector.broadcast %cst_10 : f32 to vector<1x1xf32>
    %32 = arith.mulf %30, %31 : vector<1x1xf32>
    %33 = vector.shape_cast %32 : vector<1x1xf32> to vector<1x1xf32>
    %34 = vector.broadcast %33 : vector<1x1xf32> to vector<8x128xf32>
    %c0_11 = arith.constant 0 : index
    %c0_12 = arith.constant 0 : index
    %35 = vector.load %arg3[%c0_11, %c0_12] : memref<8x128xf32, #tpu.memory_space<vmem>>, vector<8x128xf32>
    tpu.vector_store %arg3[%c0_11, %c0_12], %34 {strides = array<i32>} : memref<8x128xf32, #tpu.memory_space<vmem>>, vector<8x128xf32>,
    return
  }
  func.func @transform_0(%arg0: i32) -> (i32, i32) {
    %c0_i32 = arith.constant 0 : i32
    %c0_i32_0 = arith.constant 0 : i32
    return %arg0, %c0_i32 : i32, i32
  }
  func.func @transform_1(%arg0: i32) -> (i32, i32) {
    %c0_i32 = arith.constant 0 : i32
    %c0_i32_0 = arith.constant 0 : i32
    return %arg0, %c0_i32 : i32, i32
  }
  func.func @transform_2(%arg0: i32) -> (i32, i32) {
    %c0_i32 = arith.constant 0 : i32
    %c0_i32_0 = arith.constant 0 : i32
    return %arg0, %c0_i32 : i32, i32
  }
}

</mosaic_0001>

<llo_original>
// kernel: tpu_custom_call.1
$region0: #{tpu_custom_call.1}
  #allocation0 [shape = 'u32[]', space=smem, size = 0x4, offset = 0x4, fixed_abs, tag = 'smem constant byte address 0x4 - core index']
  #allocation1 [shape = 'u32[144,128]{1,0:T(1,128)}', space=vmem, size = 0x12000, scoped, tag = 'internal scratch']
  %s0 = inlined_call_operand.vmem [shape: f32[8,32], index: 0, kind: input, shape index: {}]
  %s1 = inlined_call_operand.vmem [shape: s32[8,1], index: 1, kind: input, shape index: {}]
  %s2 = inlined_call_operand.hbm [shape: f32[8,128], index: 2, kind: output, shape index: {}]
  %s3 = sld [smem:[#allocation0]]
  $region18: #{tpu_custom_call.1} parent=0
    _
  %s5 = ssub.s32 1, %s3
  %s6 = scalar_select 0, %s5, %s3
  $region1: #{tpu_custom_call.1} parent=0
    #allocation2 [shape = 'u8[4096]{0}', space=vmem, size = 0x1000, scoped, tag = 'output window, operand 0, single buffered']
    #allocation3 [shape = 's32[1]{0}', space=sflag, size = 0x4, scoped, tag = 'scoped memory for tpu_custom_call.1']
    %7 = vsyncpa [#allocation3], 0
    // Predicated region
    $region2: #{tpu_custom_call.1} parent=1 // pred_check
      _
    $region3: #{tpu_custom_call.1} parent=1 // pred_check_branch
      %9 = sbr.rel (0) target = $region5
    $region4: #{tpu_custom_call.1} parent=1 // pred_region
      _
    $region5: #{tpu_custom_call.1} parent=1 // pred_fallthru
      _
    // Predicated region
    $region6: #{tpu_custom_call.1} parent=1 // pred_check
      _
    $region7: #{tpu_custom_call.1} parent=1 // pred_check_branch
      %11 = sbr.rel (0) target = $region9
    $region8: #{tpu_custom_call.1} parent=1 // pred_region
      _
    $region9: #{tpu_custom_call.1} parent=1 // pred_fallthru
      _
    %v12 = vld [vmem:[%s0] sm:$0xff]
    %v13 = vld [vmem:[%s1] sm:$0xff]
    %vm14 = vcmask 261120
    %v15 = vsel %vm14, %v12, -inf
    %16 = vmax.xlane.f32.xlu0 %v15
    %v17 = vpop.xlane.xlu0 %16
    %v18 = vsub.f32 %v12, %v17
    %v19 = vmul.f32 %v18, 1.442695
    %v20 = vpow.pop %v19
    %v21 = vsel %vm14, %v20, 0.0
    %22 = vadd.xlane.f32.xlu0 %v21
    %v23 = vpop.xlane.xlu0 %22
    %v24 = vlog2.pop %v23
    %v25 = vmul.f32 %v24, 0.6931472
    %v26 = vadd.f32 %v17, %v25
    %v27 = vlaneseq
    %v28 = vand.u32 %v27, 127
    %29 = vset.pattern.permute.xlu0 0
    %30 = vperm.xlu0 %29, %v13
    %v31 = vpop.permute.xlu0 %30
    %vm32 = vcmp.eq.s32.totalorder %v28, %v31
    %v33 = vsel %vm32, 0.903125, 0.003125
    %v34 = vmul.f32 %v33, %v12
    %v35 = vsel %vm14, %v34, 0.0
    %36 = vadd.xlane.f32.xlu0 %v35
    %v37 = vpop.xlane.xlu0 %36
    %v38 = vsub.f32 %v26, %v37
    %s39 = smul.u32 0, 8
    %v40 = vlaneseq
    %v41 = vshrl.u32 %v40, 7
    %v42 = vstv %s39
    %v43 = vadd.s32 %v42, %v41
    %vm44 = vcmp.lt.s32.totalorder %v43, 8
    %v45 = vsel %vm44, %v38, 0.0
    %v46 = vrot.slane %v45, 4
    %v47 = vadd.f32 %v45, %v46
    %v48 = vrot.slane %v47, 2
    %v49 = vadd.f32 %v47, %v48
    %v50 = vrot.slane %v49, 1
    %v51 = vadd.f32 %v49, %v50
    %v52 = vmul.f32 %v51, 0.0009765625
    %53 = vst [vmem:[#allocation2] sm:$0xff] %v52
    // Predicated region
    $region10: #{tpu_custom_call.1} parent=1 // pred_check
      _
    $region11: #{tpu_custom_call.1} parent=1 // pred_check_branch
      %55 = sbr.rel (0) target = $region13
    $region12: #{tpu_custom_call.1} parent=1 // pred_region
      %s57 = ssub.s32 128, 128
      %58 = vsyncadd [#allocation3], %s57
      %s60 = sshll.u32 [#allocation2], 4
      %s61 = int_to_ptr.vmem [resolvable:$true] %s60
      %63 = dma.vmem_to_hbm [thread:$0]  %s61, 128, %s2, [#allocation3]
    $region13: #{tpu_custom_call.1} parent=1 // pred_fallthru
      _
    // Predicated region
    $region14: #{tpu_custom_call.1} parent=1 // pred_check
      _
    $region15: #{tpu_custom_call.1} parent=1 // pred_check_branch
      %65 = sbr.rel (0) target = $region17
    $region16: #{tpu_custom_call.1} parent=1 // pred_region
      %66 = dma.done [#allocation3], 128
    $region17: #{tpu_custom_call.1} parent=1 // pred_fallthru
      _
    %67 = vsyncpa [#allocation3], 1

</llo_original>
